<compile_context>
chip_gen: v7x
topology: tpu7x:2x2x1
jax: 0.10.0
libtpu: 0.0.40
codegen_flags: <defaults>
</compile_context>

<pallas_src>
import functools

import jax
import jax.numpy as jnp
import numpy as np
from jax.experimental import pallas as pl
from jax.experimental.pallas import tpu as pltpu

_NEG_INF = -1e30  # padding value for padded class columns (acts as -inf in softmax)


def _log_softmax(z):
    m = jnp.max(z, axis=-1, keepdims=True)
    s = z - m
    lse = jnp.log(jnp.sum(jnp.exp(s), axis=-1, keepdims=True))
    return s - lse


def _log_softmax_and_softmax(z):
    # Returns (log_softmax(z), softmax(z)) reusing exp()/denominator.
    m = jnp.max(z, axis=-1, keepdims=True)
    s = z - m
    e = jnp.exp(s)
    denom = jnp.sum(e, axis=-1, keepdims=True)
    logp = s - jnp.log(denom)
    p = e / denom
    return logp, p


def _distill_loss_kernel(x_ref, wt_ref, bt_ref, cls_ref, dst_ref, lbl_ref,
                         out_ref, acc_ref, *, alpha, tau, batch_total, n_valid):
    k = pl.program_id(1)
    nk = pl.num_programs(1)

    # ---- init teacher-logit accumulator at the first K step of this batch tile ----
    @pl.when(k == 0)
    def _init():
        acc_ref[...] = jnp.zeros_like(acc_ref)

    # ---- streamed teacher matmul: bf16 operands, f32 accumulation on the MXU ----
    acc_ref[...] += jnp.dot(x_ref[...], wt_ref[...],
                            preferred_element_type=jnp.float32)

    # ---- epilogue: CE + soft-KL, only after the last K step ----
    @pl.when(k == nk - 1)
    def _epilogue():
        tb, n_pad = acc_ref.shape
        inv_tau = jnp.float32(1.0 / tau)

        # base loss: CrossEntropy(cls_tokens, labels), partial sum for this tile
        cls = cls_ref[...].astype(jnp.float32)
        logp_cls = _log_softmax(cls)
        col = jax.lax.broadcasted_iota(jnp.int32, (tb, n_pad), 1)
        onehot = (col == lbl_ref[...]).astype(jnp.float32)   # lbl_ref: [tb, 1] int32
        base_sum = -jnp.sum(onehot * logp_cls)

        # soft distillation: KLDiv(sum, log_target=True) on temperature-scaled log-softmax
        dst = dst_ref[...].astype(jnp.float32)
        logp_s = _log_softmax(dst * inv_tau)
        t_logits = acc_ref[...] + bt_ref[...].astype(jnp.float32)
        logp_t, p_t = _log_softmax_and_softmax(t_logits * inv_tau)
        kl_sum = jnp.sum(p_t * (logp_t - logp_s))

        tile_loss = (base_sum * jnp.float32((1.0 - alpha) / batch_total)
                     + kl_sum * jnp.float32(alpha * tau * tau / (batch_total * n_valid)))

        # Lane-dense (8,128) output block: tile_loss at [0,0], zeros elsewhere.
        r = jax.lax.broadcasted_iota(jnp.int32, (8, 128), 0)
        c = jax.lax.broadcasted_iota(jnp.int32, (8, 128), 1)
        out_ref[...] = jnp.where((r == 0) & (c == 0), tile_loss, jnp.float32(0.0))


def distillation_loss(inputs_nchw, cls_tokens, distil_tokens, labels,
                      teacher_w, teacher_b, *, alpha=0.1, tau=3.0,
                      block_b=8, block_k=2048, matmul_dtype=jnp.bfloat16):
    """Returns scalar loss (float32). inputs_nchw: [B, C, H, W]."""
    B = inputs_nchw.shape[0]
    N = cls_tokens.shape[1]
    F = int(np.prod(inputs_nchw.shape[1:]))

    # --- batch tiling (parallel axis) ---
    tb = block_b if (B % block_b == 0) else B
    num_b = B // tb

    # --- pad the class dim to a lane multiple of 128 ---
    n_pad = max(128, ((N + 127) // 128) * 128)

    # --- contraction (feature) tiling ---
    tk = min(int(block_k), max(128, ((F + 127) // 128) * 128))
    tk = max(128, (tk // 128) * 128)
    f_pad = ((F + tk - 1) // tk) * tk
    num_k = f_pad // tk

    # --- wrapper-side prep: flatten (torch.flatten semantics), zero-pad F, pad N with -inf,
    #     ship teacher operands as bf16 (halves HBM bytes; MXU is natively bf16) ---
    x = inputs_nchw.reshape(B, F)
    x = jnp.pad(x, ((0, 0), (0, f_pad - F))).astype(matmul_dtype)
    w = jnp.pad(teacher_w, ((0, f_pad - F), (0, n_pad - N))).astype(matmul_dtype)
    bt = jnp.pad(teacher_b.reshape(1, N).astype(jnp.float32),
                 ((0, 0), (0, n_pad - N)), constant_values=_NEG_INF)
    cls = jnp.pad(cls_tokens, ((0, 0), (0, n_pad - N)), constant_values=_NEG_INF)
    dst = jnp.pad(distil_tokens, ((0, 0), (0, n_pad - N)), constant_values=_NEG_INF)
    lbl = labels.reshape(B, 1).astype(jnp.int32)

    # --- VMEM budget estimate (double-buffered blocks + scratch), with headroom ---
    mm_bytes = jnp.dtype(matmul_dtype).itemsize
    est = (2 * tk * n_pad * mm_bytes      # W tiles (double buffered)
           + 2 * tb * tk * mm_bytes       # x tiles
           + 2 * 2 * tb * n_pad * 4       # cls + dst blocks
           + 2 * 1 * n_pad * 4            # bias
           + 2 * tb * 128 * 4             # labels (lane-padded)
           + tb * n_pad * 4               # f32 accumulator scratch
           + 2 * 8 * 128 * 4)             # output block
    vmem_limit = min(int(est * 2) + (4 << 20), 100 << 20)

    kernel = functools.partial(_distill_loss_kernel, alpha=float(alpha),
                               tau=float(tau), batch_total=B, n_valid=N)

    grid_spec = pltpu.PrefetchScalarGridSpec(
        num_scalar_prefetch=0,
        grid=(num_b, num_k),
        in_specs=[
            pl.BlockSpec((tb, tk), lambda b, k: (b, k)),      # x      [B, F_pad]  bf16
            pl.BlockSpec((tk, n_pad), lambda b, k: (k, 0)),   # W      [F_pad, Np] bf16
            pl.BlockSpec((1, n_pad), lambda b, k: (0, 0)),    # bias   [1, Np]     f32
            pl.BlockSpec((tb, n_pad), lambda b, k: (b, 0)),   # cls    [B, Np]
            pl.BlockSpec((tb, n_pad), lambda b, k: (b, 0)),   # distil [B, Np]
            pl.BlockSpec((tb, 1), lambda b, k: (b, 0)),       # labels [B, 1] int32
        ],
        out_specs=pl.BlockSpec((8, 128), lambda b, k: (b, 0)),
        scratch_shapes=[pltpu.VMEM((tb, n_pad), jnp.float32)],
    )

    out = pl.pallas_call(
        kernel,
        out_shape=jax.ShapeDtypeStruct((num_b * 8, 128), jnp.float32),
        grid_spec=grid_spec,
        compiler_params=pltpu.CompilerParams(
            dimension_semantics=("parallel", "arbitrary"),
            vmem_limit_bytes=vmem_limit),
    )(x, w, bt, cls, dst, lbl)

    # Per-batch-tile partial losses live at [8*b, 0]; everything else is zero.
    return jnp.sum(out)


def _reference_loss(inputs_nchw, cls_tokens, distil_tokens, labels,
                    teacher_w, teacher_b, *, alpha=0.1, tau=3.0,
                    matmul_dtype=jnp.bfloat16):
    """Pure-JAX reference mirroring the PyTorch module (same bf16 teacher operands)."""
    B = inputs_nchw.shape[0]
    x_flat = inputs_nchw.reshape(B, -1).astype(matmul_dtype)
    teacher = jnp.dot(x_flat, teacher_w.astype(matmul_dtype),
                      preferred_element_type=jnp.float32) + teacher_b[None, :].astype(jnp.float32)
    logp_cls = jax.nn.log_softmax(cls_tokens.astype(jnp.float32), axis=1)
    base = -jnp.mean(jnp.take_along_axis(logp_cls, labels[:, None].astype(jnp.int32), axis=1))
    lp_s = jax.nn.log_softmax(distil_tokens.astype(jnp.float32) / tau, axis=1)
    lp_t = jax.nn.log_softmax(teacher / tau, axis=1)
    kl = jnp.sum(jnp.exp(lp_t) * (lp_t - lp_s))
    distil = kl * (tau * tau) / distil_tokens.size
    return base * (1.0 - alpha) + distil * alpha


if __name__ == "__main__":
    # Small deterministic example shapes (exercises 2 batch tiles x 2 K tiles).
    B, C, H, W = 16, 4, 16, 16
    NUM_CLASSES = 128
    F = C * H * W

    key = jax.random.PRNGKey(0)
    k1, k2, k3, k4, k5, k6 = jax.random.split(key, 6)

    inputs = jax.random.normal(k1, (B, C, H, W), dtype=jnp.float32)
    cls_tokens = jax.random.normal(k2, (B, NUM_CLASSES), dtype=jnp.float32)
    distil_tokens = jax.random.normal(k3, (B, NUM_CLASSES), dtype=jnp.float32)
    labels = jax.random.randint(k4, (B,), 0, NUM_CLASSES, dtype=jnp.int32)

    # Deterministic synthetic teacher (linear head) parameters.
    teacher_w = jax.random.normal(k5, (F, NUM_CLASSES), dtype=jnp.float32) * 0.02
    teacher_b = jax.random.normal(k6, (NUM_CLASSES,), dtype=jnp.float32) * 0.01

    loss = distillation_loss(inputs, cls_tokens, distil_tokens, labels,
                             teacher_w, teacher_b, alpha=0.1, tau=3.0,
                             block_b=8, block_k=512)
    loss = jax.block_until_ready(loss)

    ref = _reference_loss(inputs, cls_tokens, distil_tokens, labels,
                          teacher_w, teacher_b, alpha=0.1, tau=3.0)
    np.testing.assert_allclose(np.asarray(loss), np.asarray(ref), rtol=5e-4, atol=5e-4)

    print("KERNEL_OK")
</pallas_src>

<mosaic_0001>
module attributes {stable_mosaic.version = 11 : i64} {
  func.func @_distill_loss_kernel(%arg0: i32, %arg1: i32, %arg2: memref<8x512xbf16, #tpu.memory_space<vmem>>, %arg3: memref<512x128xbf16, #tpu.memory_space<vmem>>, %arg4: memref<1x128xf32, #tpu.memory_space<vmem>>, %arg5: memref<8x128xf32, #tpu.memory_space<vmem>>, %arg6: memref<8x128xf32, #tpu.memory_space<vmem>>, %arg7: memref<8x1xi32, #tpu.memory_space<vmem>>, %arg8: memref<8x128xf32, #tpu.memory_space<vmem>>, %arg9: memref<8x128xf32, #tpu.memory_space<vmem>>) attributes {dimension_semantics = [#tpu.dimension_semantics<parallel>, #tpu.dimension_semantics<arbitrary>], iteration_bounds = array<i64: 2, 2>, scalar_prefetch = 0 : i64, scratch_operands = 1 : i64, tpu.core_type = #tpu.core_type<tc>, window_params = [{transform_indices = @transform_0, window_bounds = array<i64: 8, 512>}, {transform_indices = @transform_1, window_bounds = array<i64: 512, 128>}, {pipeline_mode = #tpu.pipeline_mode<synchronous>, transform_indices = @transform_2, window_bounds = array<i64: 1, 128>}, {transform_indices = @transform_3, window_bounds = array<i64: 8, 128>}, {transform_indices = @transform_4, window_bounds = array<i64: 8, 128>}, {transform_indices = @transform_5, window_bounds = array<i64: 8, 1>}, {transform_indices = @transform_6, window_bounds = array<i64: 8, 128>}]} {
    %c0_i32 = arith.constant 0 : i32
    %0 = arith.cmpi eq, %arg1, %c0_i32 : i32
    %1 = arith.extui %0 : i1 to i32
    %c0_i32_0 = arith.constant 0 : i32
    %2 = arith.cmpi ne, %1, %c0_i32_0 : i32
    scf.if %2 {
      %cst_9 = arith.constant 0.000000e+00 : f32
      %12 = vector.broadcast %cst_9 : f32 to vector<8x128xf32>
      %c0_10 = arith.constant 0 : index
      %c0_11 = arith.constant 0 : index
      %13 = vector.load %arg9[%c0_10, %c0_11] : memref<8x128xf32, #tpu.memory_space<vmem>>, vector<8x128xf32>
      tpu.vector_store %arg9[%c0_10, %c0_11], %12 {strides = array<i32>} : memref<8x128xf32, #tpu.memory_space<vmem>>, vector<8x128xf32>,
    } else {
    }
    %c0 = arith.constant 0 : index
    %c0_1 = arith.constant 0 : index
    %3 = vector.load %arg9[%c0, %c0_1] : memref<8x128xf32, #tpu.memory_space<vmem>>, vector<8x128xf32>
    %c0_2 = arith.constant 0 : index
    %c0_3 = arith.constant 0 : index
    %4 = vector.load %arg2[%c0_2, %c0_3] : memref<8x512xbf16, #tpu.memory_space<vmem>>, vector<8x512xbf16>
    %c0_4 = arith.constant 0 : index
    %c0_5 = arith.constant 0 : index
    %5 = vector.load %arg3[%c0_4, %c0_5] : memref<512x128xbf16, #tpu.memory_space<vmem>>, vector<512x128xbf16>
    %cst = arith.constant dense<0.000000e+00> : vector<8x128xf32>
    %6 = tpu.matmul %4, %5, %cst {dimension_numbers = #tpu.dot_dimension_numbers<[1], [0], [0], [1], [0, 0, 1, 1], [], []>} : vector<8x512xbf16>, vector<512x128xbf16>, vector<8x128xf32> -> vector<8x128xf32>
    %7 = arith.addf %3, %6 : vector<8x128xf32>
    %c0_6 = arith.constant 0 : index
    %c0_7 = arith.constant 0 : index
    %8 = vector.load %arg9[%c0_6, %c0_7] : memref<8x128xf32, #tpu.memory_space<vmem>>, vector<8x128xf32>
    tpu.vector_store %arg9[%c0_6, %c0_7], %7 {strides = array<i32>} : memref<8x128xf32, #tpu.memory_space<vmem>>, vector<8x128xf32>,
    %c1_i32 = arith.constant 1 : i32
    %9 = arith.cmpi eq, %arg1, %c1_i32 : i32
    %10 = arith.extui %9 : i1 to i32
    %c0_i32_8 = arith.constant 0 : i32
    %11 = arith.cmpi ne, %10, %c0_i32_8 : i32
    scf.if %11 {
      %c0_9 = arith.constant 0 : index
      %c0_10 = arith.constant 0 : index
      %12 = vector.load %arg5[%c0_9, %c0_10] : memref<8x128xf32, #tpu.memory_space<vmem>>, vector<8x128xf32>
      %cst_11 = arith.constant dense<0xFF800000> : vector<8xf32>
      %13 = vector.multi_reduction <maximumf>, %12, %cst_11 [1] : vector<8x128xf32> to vector<8xf32>
      %14 = vector.shape_cast %13 : vector<8xf32> to vector<8x1xf32>
      %15 = vector.broadcast %14 : vector<8x1xf32> to vector<8x128xf32>
      %16 = arith.subf %12, %15 : vector<8x128xf32>
      %17 = math.exp %16 : vector<8x128xf32>
      %cst_12 = arith.constant dense<0.000000e+00> : vector<8xf32>
      %18 = vector.multi_reduction <add>, %17, %cst_12 [1] : vector<8x128xf32> to vector<8xf32>
      %19 = vector.shape_cast %18 : vector<8xf32> to vector<8x1xf32>
      %20 = math.log %19 : vector<8x1xf32>
      %21 = vector.broadcast %20 : vector<8x1xf32> to vector<8x128xf32>
      %22 = arith.subf %16, %21 : vector<8x128xf32>
      %23 = tpu.iota {dimensions = array<i32: 1>} : vector<8x128xi32>
      %c0_13 = arith.constant 0 : index
      %c0_14 = arith.constant 0 : index
      %24 = vector.load %arg7[%c0_13, %c0_14] : memref<8x1xi32, #tpu.memory_space<vmem>>, vector<8x1xi32>
      %25 = vector.broadcast %24 : vector<8x1xi32> to vector<8x128xi32>
      %26 = arith.cmpi eq, %23, %25 : vector<8x128xi32>
      %27 = arith.extui %26 : vector<8x128xi1> to vector<8x128xi32>
      %28 = arith.sitofp %27 : vector<8x128xi32> to vector<8x128xf32>
      %29 = arith.mulf %28, %22 : vector<8x128xf32>
      %30 = vector.shape_cast %29 : vector<8x128xf32> to vector<1x8x128xf32>
      %cst_15 = arith.constant dense<0.000000e+00> : vector<1xf32>
      %31 = vector.multi_reduction <add>, %30, %cst_15 [1, 2] : vector<1x8x128xf32> to vector<1xf32>
      %32 = vector.shape_cast %31 : vector<1xf32> to vector<1x1x1xf32>
      %33 = vector.extract %32[0, 0, 0] : f32 from vector<1x1x1xf32>
      %cst_16 = arith.constant 0.000000e+00 : f32
      %34 = arith.subf %cst_16, %33 : f32
      %c0_17 = arith.constant 0 : index
      %c0_18 = arith.constant 0 : index
      %35 = vector.load %arg6[%c0_17, %c0_18] : memref<8x128xf32, #tpu.memory_space<vmem>>, vector<8x128xf32>
      %cst_19 = arith.constant 0.333333343 : f32
      %36 = vector.broadcast %cst_19 : f32 to vector<8x128xf32>
      %37 = arith.mulf %35, %36 : vector<8x128xf32>
      %cst_20 = arith.constant dense<0xFF800000> : vector<8xf32>
      %38 = vector.multi_reduction <maximumf>, %37, %cst_20 [1] : vector<8x128xf32> to vector<8xf32>
      %39 = vector.shape_cast %38 : vector<8xf32> to vector<8x1xf32>
      %40 = vector.broadcast %39 : vector<8x1xf32> to vector<8x128xf32>
      %41 = arith.subf %37, %40 : vector<8x128xf32>
      %42 = math.exp %41 : vector<8x128xf32>
      %cst_21 = arith.constant dense<0.000000e+00> : vector<8xf32>
      %43 = vector.multi_reduction <add>, %42, %cst_21 [1] : vector<8x128xf32> to vector<8xf32>
      %44 = vector.shape_cast %43 : vector<8xf32> to vector<8x1xf32>
      %45 = math.log %44 : vector<8x1xf32>
      %46 = vector.broadcast %45 : vector<8x1xf32> to vector<8x128xf32>
      %47 = arith.subf %41, %46 : vector<8x128xf32>
      %c0_22 = arith.constant 0 : index
      %c0_23 = arith.constant 0 : index
      %48 = vector.load %arg9[%c0_22, %c0_23] : memref<8x128xf32, #tpu.memory_space<vmem>>, vector<8x128xf32>
      %c0_24 = arith.constant 0 : index
      %c0_25 = arith.constant 0 : index
      %49 = vector.load %arg4[%c0_24, %c0_25] : memref<1x128xf32, #tpu.memory_space<vmem>>, vector<1x128xf32>
      %50 = vector.broadcast %49 : vector<1x128xf32> to vector<8x128xf32>
      %51 = arith.addf %48, %50 : vector<8x128xf32>
      %cst_26 = arith.constant 0.333333343 : f32
      %52 = vector.broadcast %cst_26 : f32 to vector<8x128xf32>
      %53 = arith.mulf %51, %52 : vector<8x128xf32>
      %cst_27 = arith.constant dense<0xFF800000> : vector<8xf32>
      %54 = vector.multi_reduction <maximumf>, %53, %cst_27 [1] : vector<8x128xf32> to vector<8xf32>
      %55 = vector.shape_cast %54 : vector<8xf32> to vector<8x1xf32>
      %56 = vector.broadcast %55 : vector<8x1xf32> to vector<8x128xf32>
      %57 = arith.subf %53, %56 : vector<8x128xf32>
      %58 = math.exp %57 : vector<8x128xf32>
      %cst_28 = arith.constant dense<0.000000e+00> : vector<8xf32>
      %59 = vector.multi_reduction <add>, %58, %cst_28 [1] : vector<8x128xf32> to vector<8xf32>
      %60 = vector.shape_cast %59 : vector<8xf32> to vector<8x1xf32>
      %61 = math.log %60 : vector<8x1xf32>
      %62 = vector.broadcast %61 : vector<8x1xf32> to vector<8x128xf32>
      %63 = arith.subf %57, %62 : vector<8x128xf32>
      %64 = vector.broadcast %60 : vector<8x1xf32> to vector<8x128xf32>
      %65 = arith.divf %58, %64 : vector<8x128xf32>
      %66 = arith.subf %63, %47 : vector<8x128xf32>
      %67 = arith.mulf %65, %66 : vector<8x128xf32>
      %68 = vector.shape_cast %67 : vector<8x128xf32> to vector<1x8x128xf32>
      %cst_29 = arith.constant dense<0.000000e+00> : vector<1xf32>
      %69 = vector.multi_reduction <add>, %68, %cst_29 [1, 2] : vector<1x8x128xf32> to vector<1xf32>
      %70 = vector.shape_cast %69 : vector<1xf32> to vector<1x1x1xf32>
      %71 = vector.extract %70[0, 0, 0] : f32 from vector<1x1x1xf32>
      %cst_30 = arith.constant 5.625000e-02 : f32
      %72 = arith.mulf %34, %cst_30 : f32
      %cst_31 = arith.constant 4.39453113E-4 : f32
      %73 = arith.mulf %71, %cst_31 : f32
      %74 = arith.addf %72, %73 : f32
      %75 = tpu.iota {dimensions = array<i32: 0>} : vector<8x128xi32>
      %76 = tpu.iota {dimensions = array<i32: 1>} : vector<8x128xi32>
      %c0_i32_32 = arith.constant 0 : i32
      %77 = vector.broadcast %c0_i32_32 : i32 to vector<8x128xi32>
      %78 = arith.cmpi eq, %75, %77 : vector<8x128xi32>
      %c0_i32_33 = arith.constant 0 : i32
      %79 = vector.broadcast %c0_i32_33 : i32 to vector<8x128xi32>
      %80 = arith.cmpi eq, %76, %79 : vector<8x128xi32>
      %81 = arith.andi %78, %80 : vector<8x128xi1>
      %cst_34 = arith.constant 0.000000e+00 : f32
      %82 = vector.broadcast %74 : f32 to vector<8x128xf32>
      %83 = vector.broadcast %cst_34 : f32 to vector<8x128xf32>
      %84 = arith.select %81, %82, %83 : vector<8x128xi1>, vector<8x128xf32>
      %c0_35 = arith.constant 0 : index
      %c0_36 = arith.constant 0 : index
      %85 = vector.load %arg8[%c0_35, %c0_36] : memref<8x128xf32, #tpu.memory_space<vmem>>, vector<8x128xf32>
      tpu.vector_store %arg8[%c0_35, %c0_36], %84 {strides = array<i32>} : memref<8x128xf32, #tpu.memory_space<vmem>>, vector<8x128xf32>,
    } else {
    }
    return
  }
  func.func @transform_0(%arg0: i32, %arg1: i32) -> (i32, i32) {
    %c0_i32 = arith.constant 0 : i32
    return %arg0, %arg1 : i32, i32
  }
  func.func @transform_1(%arg0: i32, %arg1: i32) -> (i32, i32) {
    %c0_i32 = arith.constant 0 : i32
    %c0_i32_0 = arith.constant 0 : i32
    return %arg1, %c0_i32 : i32, i32
  }
  func.func @transform_2(%arg0: i32, %arg1: i32) -> (i32, i32) {
    %c0_i32 = arith.constant 0 : i32
    %c0_i32_0 = arith.constant 0 : i32
    %c0_i32_1 = arith.constant 0 : i32
    return %c0_i32, %c0_i32_0 : i32, i32
  }
  func.func @transform_3(%arg0: i32, %arg1: i32) -> (i32, i32) {
    %c0_i32 = arith.constant 0 : i32
    %c0_i32_0 = arith.constant 0 : i32
    return %arg0, %c0_i32 : i32, i32
  }
  func.func @transform_4(%arg0: i32, %arg1: i32) -> (i32, i32) {
    %c0_i32 = arith.constant 0 : i32
    %c0_i32_0 = arith.constant 0 : i32
    return %arg0, %c0_i32 : i32, i32
  }
  func.func @transform_5(%arg0: i32, %arg1: i32) -> (i32, i32) {
    %c0_i32 = arith.constant 0 : i32
    %c0_i32_0 = arith.constant 0 : i32
    return %arg0, %c0_i32 : i32, i32
  }
  func.func @transform_6(%arg0: i32, %arg1: i32) -> (i32, i32) {
    %c0_i32 = arith.constant 0 : i32
    %c0_i32_0 = arith.constant 0 : i32
    return %arg0, %c0_i32 : i32, i32
  }
}

</mosaic_0001>

<llo_original>
// kernel: tpu_custom_call.1
$region0: #{tpu_custom_call.1}
  #allocation0 [shape = 'u32[]', space=smem, size = 0x4, offset = 0x4, fixed_abs, tag = 'smem constant byte address 0x4 - core index']
  #allocation1 [shape = 'u32[144,128]{1,0:T(1,128)}', space=vmem, size = 0x12000, scoped, tag = 'internal scratch']
  #allocation2 [shape = 'f32[8,128]{1,0:T(8,128)}', space=vmem, size = 0x1000, scoped, tag = 'scratch operand']
  %s0 = inlined_call_operand.hbm [shape: bf16[16,1024], index: 0, kind: input, shape index: {}]
  %s1 = inlined_call_operand.hbm [shape: bf16[1024,128], index: 1, kind: input, shape index: {}]
  %s2 = inlined_call_operand.hbm [shape: f32[1,128], index: 2, kind: input, shape index: {}]
  %s3 = inlined_call_operand.vmem [shape: f32[16,128], index: 3, kind: input, shape index: {}]
  %s4 = inlined_call_operand.vmem [shape: f32[16,128], index: 4, kind: input, shape index: {}]
  %s5 = inlined_call_operand.vmem [shape: s32[16,1], index: 5, kind: input, shape index: {}]
  %s6 = inlined_call_operand.hbm [shape: f32[16,128], index: 6, kind: output, shape index: {}]
  %s7 = sld [smem:[#allocation0]]
  $region77: #{tpu_custom_call.1} parent=0
    _
  %s9 = ssub.s32 1, %s7
  %s10 = scalar_select 0, %s9, %s7
  $region1: #{tpu_custom_call.1} parent=0
    #allocation3 [shape = 'u8[16384]{0}', space=vmem, size = 0x4000, scoped, tag = 'input window, operand 0']
    #allocation4 [shape = 's32[2]{0}', space=sflag, size = 0x8, scoped, tag = 'scoped memory for tpu_custom_call.1']
    #allocation5 [shape = 's32[2]{0}', space=sflag, size = 0x8, scoped, tag = 'scoped memory for tpu_custom_call.1']
    #allocation6 [shape = 'u8[262144]{0}', space=vmem, size = 0x40000, scoped, tag = 'input window, operand 1']
    #allocation7 [shape = 's32[2]{0}', space=sflag, size = 0x8, scoped, tag = 'scoped memory for tpu_custom_call.1']
    #allocation8 [shape = 'u8[512]{0}', space=vmem, size = 0x400, scoped, tag = 'input window, operand 2, single buffered']
    #allocation9 [shape = 'u8[8192]{0}', space=vmem, size = 0x2000, scoped, tag = 'output window, operand 0']
    %11 = vsyncpa [#allocation4], 0
    %s12 = scalar_lea.sflag [#allocation4], 1
    %13 = vsyncpa %s12, 0
    %14 = vsyncpa [#allocation7], 0
    %s15 = scalar_lea.sflag [#allocation7], 1
    %16 = vsyncpa %s15, 0
    %17 = vsyncpa [#allocation5], 0
    %s18 = scalar_lea.sflag [#allocation5], 1
    %19 = vsyncpa %s18, 0
    loop: start=0, step=1, limit=6
    $region2: #{tpu_custom_call.1} parent=1 // loop_pre_header
      _
    $region3: #{tpu_custom_call.1} parent=1 // loop_header
      %s21 = sphi 0, %s25
      %p22 = scmp.ge.s32.totalorder %s21, 6
      %s28 = sphi 0, %s40
      %s29 = sphi 0, %s36
      %s30 = sphi 0, %s28
      %s31 = sphi 0, %s29
      %s32 = sphi 0, %s30
      %s33 = sphi 0, %s31
      %s45 = sphi 0, %s47
      %s48 = sphi 0, %s45
      %s49 = sphi 0, %s48
      %s65 = sphi 0, %s49
      %s71 = sphi 0, %s73
      %s74 = sphi 0, %s71
      %s75 = sphi 0, %s74
      %s91 = sphi 0, %s75
      %s95 = sphi 0, %s95
      %s97 = sphi 0, %s95
      %s98 = sphi 0, %s97
      %s112 = sphi 0, %s98
      %s118 = sphi 0, %s120
      %s121 = sphi 0, %s118
      %s122 = sphi 0, %s121
      %s138 = sphi 0, %s122
      %s144 = sphi 0, %s146
      %s147 = sphi 0, %s144
      %s148 = sphi 0, %s147
      %s164 = sphi 0, %s148
      %s170 = sphi 0, %s172
      %s173 = sphi 0, %s170
      %s174 = sphi 0, %s173
      %s190 = sphi 0, %s174
      %s196 = sphi 0, %s198
      %s199 = sphi 0, %s196
      %s200 = sphi 0, %s199
      %s216 = sphi 0, %s200
    $region4: #{tpu_custom_call.1} parent=1 // loop_header_branch
      %24 = sbr.rel (%p22) target = $region8
    $region5: #{tpu_custom_call.1} parent=1 // loop_body
      %s26 = ssub.s32 %s21, 1
      %s27 = ssub.s32 %s21, 2
      %s34 = sadd.s32 1, %s29
      %p35 = scmp.ge.s32.totalorder %s34, 2
      %s36 = scalar_select %p35, 0, %s34
      %s37 = sadd.s32 1, %s28
      %s38 = scalar_select %p35, %s37, %s28
      %p39 = scmp.ge.s32.totalorder %s38, 2
      %s40 = scalar_select %p39, 0, %s38
      %s41 = ssub.s32 %s28, %s40
      %s42 = ssub.s32 %s29, %s36
      %s43 = sor.u32 %s41, %s42
      %p44 = scmp.eq.s32.totalorder %s43, 0
      %s46 = sadd.s32 %s45, 1
      %s47 = scalar_select %p44, %s45, %s46
      %p50 = pneg %p44
      %p51 = scmp.eq.s32.totalorder %s21, 3
      %p52 = por %p50, %p51
      %p53 = scmp.ne.s32.totalorder %s45, %s48
      %p54 = scmp.eq.s32.totalorder %s21, 0
      %p55 = por %p53, %p54
      %p56 = scmp.ne.s32.totalorder %s45, %s48
      %p57 = scmp.eq.s32.totalorder %s26, 3
      %p58 = por %p56, %p57
      %p59 = scmp.ne.s32.totalorder %s48, %s49
      %p60 = scmp.eq.s32.totalorder %s26, 0
      %p61 = por %p59, %p60
      %p62 = scmp.ne.s32.totalorder %s48, %s49
      %p63 = scmp.eq.s32.totalorder %s27, 3
      %p64 = por %p62, %p63
      %p66 = scmp.ne.s32.totalorder %s49, %s65
      %p67 = scmp.eq.s32.totalorder %s27, 0
      %p68 = por %p66, %p67
      %s69 = ssub.s32 %s29, %s36
      %p70 = scmp.eq.s32.totalorder %s69, 0
      %s72 = sadd.s32 %s71, 1
      %s73 = scalar_select %p70, %s71, %s72
      %p76 = pneg %p70
      %p77 = scmp.eq.s32.totalorder %s21, 3
      %p78 = por %p76, %p77
      %p79 = scmp.ne.s32.totalorder %s71, %s74
      %p80 = scmp.eq.s32.totalorder %s21, 0
      %p81 = por %p79, %p80
      %p82 = scmp.ne.s32.totalorder %s71, %s74
      %p83 = scmp.eq.s32.totalorder %s26, 3
      %p84 = por %p82, %p83
      %p85 = scmp.ne.s32.totalorder %s74, %s75
      %p86 = scmp.eq.s32.totalorder %s26, 0
      %p87 = por %p85, %p86
      %p88 = scmp.ne.s32.totalorder %s74, %s75
      %p89 = scmp.eq.s32.totalorder %s27, 3
      %p90 = por %p88, %p89
      %p92 = scmp.ne.s32.totalorder %s75, %s91
      %p93 = scmp.eq.s32.totalorder %s27, 0
      %p94 = por %p92, %p93
      %s96 = sadd.s32 %s95, 1
      %p99 = scmp.eq.s32.totalorder %s21, 3
      %p100 = scmp.ne.s32.totalorder %s95, %s97
      %p101 = scmp.eq.s32.totalorder %s21, 0
      %p102 = por %p100, %p101
      %p103 = scmp.ne.s32.totalorder %s95, %s97
      %p104 = scmp.eq.s32.totalorder %s26, 3
      %p105 = por %p103, %p104
      %p106 = scmp.ne.s32.totalorder %s97, %s98
      %p107 = scmp.eq.s32.totalorder %s26, 0
      %p108 = por %p106, %p107
      %p109 = scmp.ne.s32.totalorder %s97, %s98
      %p110 = scmp.eq.s32.totalorder %s27, 3
      %p111 = por %p109, %p110
      %p113 = scmp.ne.s32.totalorder %s98, %s112
      %p114 = scmp.eq.s32.totalorder %s27, 0
      %p115 = por %p113, %p114
      %s116 = ssub.s32 %s28, %s40
      %p117 = scmp.eq.s32.totalorder %s116, 0
      %s119 = sadd.s32 %s118, 1
      %s120 = scalar_select %p117, %s118, %s119
      %p123 = pneg %p117
      %p124 = scmp.eq.s32.totalorder %s21, 3
      %p125 = por %p123, %p124
      %p126 = scmp.ne.s32.totalorder %s118, %s121
      %p127 = scmp.eq.s32.totalorder %s21, 0
      %p128 = por %p126, %p127
      %p129 = scmp.ne.s32.totalorder %s118, %s121
      %p130 = scmp.eq.s32.totalorder %s26, 3
      %p131 = por %p129, %p130
      %p132 = scmp.ne.s32.totalorder %s121, %s122
      %p133 = scmp.eq.s32.totalorder %s26, 0
      %p134 = por %p132, %p133
      %p135 = scmp.ne.s32.totalorder %s121, %s122
      %p136 = scmp.eq.s32.totalorder %s27, 3
      %p137 = por %p135, %p136
      %p139 = scmp.ne.s32.totalorder %s122, %s138
      %p140 = scmp.eq.s32.totalorder %s27, 0
      %p141 = por %p139, %p140
      %s142 = ssub.s32 %s28, %s40
      %p143 = scmp.eq.s32.totalorder %s142, 0
      %s145 = sadd.s32 %s144, 1
      %s146 = scalar_select %p143, %s144, %s145
      %p149 = pneg %p143
      %p150 = scmp.eq.s32.totalorder %s21, 3
      %p151 = por %p149, %p150
      %p152 = scmp.ne.s32.totalorder %s144, %s147
      %p153 = scmp.eq.s32.totalorder %s21, 0
      %p154 = por %p152, %p153
      %p155 = scmp.ne.s32.totalorder %s144, %s147
      %p156 = scmp.eq.s32.totalorder %s26, 3
      %p157 = por %p155, %p156
      %p158 = scmp.ne.s32.totalorder %s147, %s148
      %p159 = scmp.eq.s32.totalorder %s26, 0
      %p160 = por %p158, %p159
      %p161 = scmp.ne.s32.totalorder %s147, %s148
      %p162 = scmp.eq.s32.totalorder %s27, 3
      %p163 = por %p161, %p162
      %p165 = scmp.ne.s32.totalorder %s148, %s164
      %p166 = scmp.eq.s32.totalorder %s27, 0
      %p167 = por %p165, %p166
      %s168 = ssub.s32 %s28, %s40
      %p169 = scmp.eq.s32.totalorder %s168, 0
      %s171 = sadd.s32 %s170, 1
      %s172 = scalar_select %p169, %s170, %s171
      %p175 = pneg %p169
      %p176 = scmp.eq.s32.totalorder %s21, 3
      %p177 = por %p175, %p176
      %p178 = scmp.ne.s32.totalorder %s170, %s173
      %p179 = scmp.eq.s32.totalorder %s21, 0
      %p180 = por %p178, %p179
      %p181 = scmp.ne.s32.totalorder %s170, %s173
      %p182 = scmp.eq.s32.totalorder %s26, 3
      %p183 = por %p181, %p182
      %p184 = scmp.ne.s32.totalorder %s173, %s174
      %p185 = scmp.eq.s32.totalorder %s26, 0
      %p186 = por %p184, %p185
      %p187 = scmp.ne.s32.totalorder %s173, %s174
      %p188 = scmp.eq.s32.totalorder %s27, 3
      %p189 = por %p187, %p188
      %p191 = scmp.ne.s32.totalorder %s174, %s190
      %p192 = scmp.eq.s32.totalorder %s27, 0
      %p193 = por %p191, %p192
      %s194 = ssub.s32 %s28, %s40
      %p195 = scmp.eq.s32.totalorder %s194, 0
      %s197 = sadd.s32 %s196, 1
      %s198 = scalar_select %p195, %s196, %s197
      %p201 = pneg %p195
      %p202 = scmp.eq.s32.totalorder %s21, 3
      %p203 = por %p201, %p202
      %p204 = scmp.ne.s32.totalorder %s196, %s199
      %p205 = scmp.eq.s32.totalorder %s21, 0
      %p206 = por %p204, %p205
      %p207 = scmp.ne.s32.totalorder %s196, %s199
      %p208 = scmp.eq.s32.totalorder %s26, 3
      %p209 = por %p207, %p208
      %p210 = scmp.ne.s32.totalorder %s199, %s200
      %p211 = scmp.eq.s32.totalorder %s26, 0
      %p212 = por %p210, %p211
      %p213 = scmp.ne.s32.totalorder %s199, %s200
      %p214 = scmp.eq.s32.totalorder %s27, 3
      %p215 = por %p213, %p214
      %p217 = scmp.ne.s32.totalorder %s200, %s216
      %p218 = scmp.eq.s32.totalorder %s27, 0
      %p219 = por %p217, %p218
      %p220 = scmp.le.s32.totalorder 1, %s21
      %p221 = scmp.lt.s32.totalorder %s21, 5
      %p222 = pnand %p220, %p221
      %p223 = pneg %p222
      // Predicated region
      $region9: #{tpu_custom_call.1} parent=5 // pred_check
        _
      $region10: #{tpu_custom_call.1} parent=5 // pred_check_branch
        %225 = sbr.rel (%p222) target = $region12
      $region11: #{tpu_custom_call.1} parent=5 // pred_region
        %s226 = ssub.s32 %s21, 1
        // Predicated region
        $region13: #{tpu_custom_call.1} parent=11 // pred_check
          %p227 = pneg %p108
        $region14: #{tpu_custom_call.1} parent=11 // pred_check_branch
          %229 = sbr.rel (%p227) target = $region16
        $region15: #{tpu_custom_call.1} parent=11 // pred_region
          %s231 = ssub.s32 16, 16
          %232 = vsyncadd [#allocation7], %s231
          %s234 = sshll.u32 [#allocation8], 4
          %s235 = int_to_ptr.vmem [resolvable:$true] %s234
          %237 = dma.hbm_to_vmem [thread:$0]  %s2, 16, %s235, [#allocation7]
        $region16: #{tpu_custom_call.1} parent=11 // pred_fallthru
          _
      $region12: #{tpu_custom_call.1} parent=5 // pred_fallthru
        _
      %p238 = scmp.lt.s32.totalorder %s21, 4
      // Predicated region
      $region17: #{tpu_custom_call.1} parent=5 // pred_check
        %p239 = pneg %p238
      $region18: #{tpu_custom_call.1} parent=5 // pred_check_branch
        %241 = sbr.rel (%p239) target = $region20
      $region19: #{tpu_custom_call.1} parent=5 // pred_region
        // Predicated region
        $region21: #{tpu_custom_call.1} parent=19 // pred_check
          %p242 = pneg %p55
        $region22: #{tpu_custom_call.1} parent=19 // pred_check_branch
          %244 = sbr.rel (%p242) target = $region24
        $region23: #{tpu_custom_call.1} parent=19 // pred_region
          %s245 = sand.u32 %s45, 1
          %s246 = scalar_lea.sflag [#allocation4], %s245
          %s247 = sand.u32 %s45, 1
          %s248 = smul.addr %s247, 16
          %s249 = scalar_lea.vmem [#allocation3], %s248
          %s250 = smul.u32 4, %s29
          %s252 = ssub.s32 256, 256
          %253 = vsyncadd %s246, %s252
          %s254 = smul.addr %s28, 8
          %s255 = sadd.s32 %s250, %s254
          %s256 = smul.addr %s255, 64
          %s257 = scalar_lea.hbm %s0, %s256
          %s259 = sshll.u32 %s249, 4
          %s260 = int_to_ptr.vmem [resolvable:$true] %s259
          %262 = dma.hbm_to_vmem [thread:$0]  %s257, 256, %s260, %s246
        $region24: #{tpu_custom_call.1} parent=19 // pred_fallthru
          _
        // Predicated region
        $region25: #{tpu_custom_call.1} parent=19 // pred_check
          %p263 = pneg %p81
        $region26: #{tpu_custom_call.1} parent=19 // pred_check_branch
          %265 = sbr.rel (%p263) target = $region28
        $region27: #{tpu_custom_call.1} parent=19 // pred_region
          %s266 = sand.u32 %s21, 1
          %s267 = scalar_lea.sflag [#allocation7], %s266
          %s268 = sand.u32 %s71, 1
          %s269 = smul.addr %s268, 256
          %s270 = scalar_lea.vmem [#allocation6], %s269
          %s271 = smul.u32 64, %s29
          %s273 = ssub.s32 4096, 4096
          %274 = vsyncadd %s267, %s273
          %s275 = smul.addr %s271, 64
          %s276 = scalar_lea.hbm %s1, %s275
          %s277 = sshll.u32 %s270, 4
          %s278 = int_to_ptr.vmem [resolvable:$true] %s277
          %283 = dma.hbm_to_vmem [thread:$0]  %s276, 4096, %s278, %s267, 64, 64, 4
        $region28: #{tpu_custom_call.1} parent=19 // pred_fallthru
          _
        // Predicated region
        $region29: #{tpu_custom_call.1} parent=19 // pred_check
          %p284 = pneg %p128
        $region30: #{tpu_custom_call.1} parent=19 // pred_check_branch
          %286 = sbr.rel (%p284) target = $region32
        $region31: #{tpu_custom_call.1} parent=19 // pred_region
          %p287 = scmp.lt.s32.totalorder %s28, 1
          %s288 = scalar_select %p287, %s28, 1
          %s289 = smul.addr %s288, 8
          %s290 = scalar_lea.vmem %s3, %s289
        $region32: #{tpu_custom_call.1} parent=19 // pred_fallthru
          _
        // Predicated region
        $region33: #{tpu_custom_call.1} parent=19 // pred_check
          %p291 = pneg %p154
        $region34: #{tpu_custom_call.1} parent=19 // pred_check_branch
          %293 = sbr.rel (%p291) target = $region36
        $region35: #{tpu_custom_call.1} parent=19 // pred_region
          %p294 = scmp.lt.s32.totalorder %s28, 1
          %s295 = scalar_select %p294, %s28, 1
          %s296 = smul.addr %s295, 8
          %s297 = scalar_lea.vmem %s4, %s296
        $region36: #{tpu_custom_call.1} parent=19 // pred_fallthru
          _
        // Predicated region
        $region37: #{tpu_custom_call.1} parent=19 // pred_check
          %p298 = pneg %p180
        $region38: #{tpu_custom_call.1} parent=19 // pred_check_branch
          %300 = sbr.rel (%p298) target = $region40
        $region39: #{tpu_custom_call.1} parent=19 // pred_region
          %p301 = scmp.lt.s32.totalorder %s28, 1
          %s302 = scalar_select %p301, %s28, 1
          %s303 = smul.addr %s302, 8
          %s304 = scalar_lea.vmem %s5, %s303
        $region40: #{tpu_custom_call.1} parent=19 // pred_fallthru
          _
      $region20: #{tpu_custom_call.1} parent=5 // pred_fallthru
        _
      %p305 = scmp.le.s32.totalorder 1, %s21
      %p306 = scmp.lt.s32.totalorder %s21, 5
      %p307 = pnand %p305, %p306
      %p308 = pneg %p307
      // Predicated region
      $region41: #{tpu_custom_call.1} parent=5 // pred_check
        _
      $region42: #{tpu_custom_call.1} parent=5 // pred_check_branch
        %310 = sbr.rel (%p307) target = $region44
      $region43: #{tpu_custom_call.1} parent=5 // pred_region
        %s311 = ssub.s32 %s21, 1
        %s312 = sand.u32 %s48, 1
        %s313 = scalar_lea.sflag [#allocation4], %s312
        %s314 = sand.u32 %s48, 1
        %s315 = smul.addr %s314, 16
        %s316 = scalar_lea.vmem [#allocation3], %s315
        // Predicated region
        $region45: #{tpu_custom_call.1} parent=43 // pred_check
          %p317 = pneg %p61
        $region46: #{tpu_custom_call.1} parent=43 // pred_check_branch
          %319 = sbr.rel (%p317) target = $region48
        $region47: #{tpu_custom_call.1} parent=43 // pred_region
          %320 = dma.done %s313, 256
        $region48: #{tpu_custom_call.1} parent=43 // pred_fallthru
          _
        %s321 = sand.u32 %s26, 1
        %s322 = scalar_lea.sflag [#allocation7], %s321
        %s323 = sand.u32 %s74, 1
        %s324 = smul.addr %s323, 256
        %s325 = scalar_lea.vmem [#allocation6], %s324
        // Predicated region
        $region49: #{tpu_custom_call.1} parent=43 // pred_check
          %p326 = pneg %p87
        $region50: #{tpu_custom_call.1} parent=43 // pred_check_branch
          %328 = sbr.rel (%p326) target = $region52
        $region51: #{tpu_custom_call.1} parent=43 // pred_region
          %329 = dma.done %s322, 4096
        $region52: #{tpu_custom_call.1} parent=43 // pred_fallthru
          _
        // Predicated region
        $region53: #{tpu_custom_call.1} parent=43 // pred_check
          %p330 = pneg %p108
        $region54: #{tpu_custom_call.1} parent=43 // pred_check_branch
          %332 = sbr.rel (%p330) target = $region56
        $region55: #{tpu_custom_call.1} parent=43 // pred_region
          %333 = dma.done [#allocation7], 16
        $region56: #{tpu_custom_call.1} parent=43 // pred_fallthru
          _
        %s334 = sand.u32 %s48, 1
        %s335 = scalar_lea.sflag [#allocation4], %s334
        %s336 = sand.u32 %s48, 1
        %s337 = smul.addr %s336, 16
        %s338 = scalar_lea.vmem [#allocation3], %s337
        %p339 = pneg %p61
        %p340 = pneg %p58
        %s341 = sand.u32 %s26, 1
        %s342 = scalar_lea.sflag [#allocation7], %s341
        %s343 = sand.u32 %s74, 1
        %s344 = smul.addr %s343, 256
        %s345 = scalar_lea.vmem [#allocation6], %s344
        %p346 = pneg %p87
        %p347 = pneg %p84
        %p348 = pneg %p108
        %p349 = pneg %p105
        %p350 = scmp.lt.s32.totalorder %s30, 1
        %s351 = scalar_select %p350, %s30, 1
        %s352 = smul.addr %s351, 8
        %s353 = scalar_lea.vmem %s3, %s352
        %p354 = pneg %p134
        %p355 = pneg %p131
        %p356 = scmp.lt.s32.totalorder %s30, 1
        %s357 = scalar_select %p356, %s30, 1
        %s358 = smul.addr %s357, 8
        %s359 = scalar_lea.vmem %s4, %s358
        %p360 = pneg %p160
        %p361 = pneg %p157
        %p362 = scmp.lt.s32.totalorder %s30, 1
        %s363 = scalar_select %p362, %s30, 1
        %s364 = smul.addr %s363, 8
        %s365 = scalar_lea.vmem %s5, %s364
        %p366 = pneg %p186
        %p367 = pneg %p183
        %p368 = pneg %p212
        %p369 = pneg %p209
        %s370 = sand.u32 %s199, 1
        %s371 = scalar_lea.sflag [#allocation5], %s370
        %s372 = sand.u32 %s199, 1
        %s373 = smul.addr %s372, 8
        %s374 = scalar_lea.vmem [#allocation9], %s373
        %s375 = smul.u32 4, %s31
        %s376 = smul.u32 64, %s31
        %p377 = scmp.lt.s32.totalorder %s30, 1
        %s378 = scalar_select %p377, %s30, 1
        %s379 = smul.addr %s378, 8
        %s380 = scalar_lea.vmem %s3, %s379
        %p381 = scmp.lt.s32.totalorder %s30, 1
        %s382 = scalar_select %p381, %s30, 1
        %s383 = smul.addr %s382, 8
        %s384 = scalar_lea.vmem %s4, %s383
        %p385 = scmp.lt.s32.totalorder %s30, 1
        %s386 = scalar_select %p385, %s30, 1
        %s387 = smul.addr %s386, 8
        %s388 = scalar_lea.vmem %s5, %s387
        %p390 = scmp.eq.s32.totalorder %s31, 0
        // Predicated region
        $region57: #{tpu_custom_call.1} parent=43 // pred_check
          %p391 = pneg %p390
        $region58: #{tpu_custom_call.1} parent=43 // pred_check_branch
          %393 = sbr.rel (%p391) target = $region60
        $region59: #{tpu_custom_call.1} parent=43 // pred_region
          %394 = vst [vmem:[#allocation2] sm:$0xff] 0.0
        $region60: #{tpu_custom_call.1} parent=43 // pred_fallthru
          _
        %v395 = vld [vmem:[#allocation2] sm:$0xff]
        %v396 = vld [vmem:[%s316] sm:$0xff]
        %v397 = vld [vmem:[%s316 + $0x8] sm:$0xff]
        %v398 = vld [vmem:[%s325] sm:$0xf]
        %v399 = vld [vmem:[%s325 + $0x4] sm:$0xf]
        %v400 = vld [vmem:[%s325 + $0x8] sm:$0xf]
        %v401 = vld [vmem:[%s325 + $0xc] sm:$0xf]
        %v402 = vld [vmem:[%s325 + $0x10] sm:$0xf]
        %v403 = vld [vmem:[%s325 + $0x14] sm:$0xf]
        %v404 = vld [vmem:[%s325 + $0x18] sm:$0xf]
        %v405 = vld [vmem:[%s325 + $0x1c] sm:$0xf]
        %v406 = vld [vmem:[%s325 + $0x20] sm:$0xf]
        %v407 = vld [vmem:[%s325 + $0x24] sm:$0xf]
        %v408 = vld [vmem:[%s325 + $0x28] sm:$0xf]
        %v409 = vld [vmem:[%s325 + $0x2c] sm:$0xf]
        %v410 = vld [vmem:[%s325 + $0x30] sm:$0xf]
        %v411 = vld [vmem:[%s325 + $0x34] sm:$0xf]
        %v412 = vld [vmem:[%s325 + $0x38] sm:$0xf]
        %v413 = vld [vmem:[%s325 + $0x3c] sm:$0xf]
        %v414 = vld [vmem:[%s325 + $0x40] sm:$0xf]
        %v415 = vld [vmem:[%s325 + $0x44] sm:$0xf]
        %v416 = vld [vmem:[%s325 + $0x48] sm:$0xf]
        %v417 = vld [vmem:[%s325 + $0x4c] sm:$0xf]
        %v418 = vld [vmem:[%s325 + $0x50] sm:$0xf]
        %v419 = vld [vmem:[%s325 + $0x54] sm:$0xf]
        %v420 = vld [vmem:[%s325 + $0x58] sm:$0xf]
        %v421 = vld [vmem:[%s325 + $0x5c] sm:$0xf]
        %v422 = vld [vmem:[%s325 + $0x60] sm:$0xf]
        %v423 = vld [vmem:[%s325 + $0x64] sm:$0xf]
        %v424 = vld [vmem:[%s325 + $0x68] sm:$0xf]
        %v425 = vld [vmem:[%s325 + $0x6c] sm:$0xf]
        %v426 = vld [vmem:[%s325 + $0x70] sm:$0xf]
        %v427 = vld [vmem:[%s325 + $0x74] sm:$0xf]
        %v428 = vld [vmem:[%s325 + $0x78] sm:$0xf]
        %v429 = vld [vmem:[%s325 + $0x7c] sm:$0xf]
        %v430 = vld [vmem:[%s325 + $0x80] sm:$0xf]
        %v431 = vld [vmem:[%s325 + $0x84] sm:$0xf]
        %v432 = vld [vmem:[%s325 + $0x88] sm:$0xf]
        %v433 = vld [vmem:[%s325 + $0x8c] sm:$0xf]
        %v434 = vld [vmem:[%s325 + $0x90] sm:$0xf]
        %v435 = vld [vmem:[%s325 + $0x94] sm:$0xf]
        %v436 = vld [vmem:[%s325 + $0x98] sm:$0xf]
        %v437 = vld [vmem:[%s325 + $0x9c] sm:$0xf]
        %v438 = vld [vmem:[%s325 + $0xa0] sm:$0xf]
        %v439 = vld [vmem:[%s325 + $0xa4] sm:$0xf]
        %v440 = vld [vmem:[%s325 + $0xa8] sm:$0xf]
        %v441 = vld [vmem:[%s325 + $0xac] sm:$0xf]
        %v442 = vld [vmem:[%s325 + $0xb0] sm:$0xf]
        %v443 = vld [vmem:[%s325 + $0xb4] sm:$0xf]
        %v444 = vld [vmem:[%s325 + $0xb8] sm:$0xf]
        %v445 = vld [vmem:[%s325 + $0xbc] sm:$0xf]
        %v446 = vld [vmem:[%s325 + $0xc0] sm:$0xf]
        %v447 = vld [vmem:[%s325 + $0xc4] sm:$0xf]
        %v448 = vld [vmem:[%s325 + $0xc8] sm:$0xf]
        %v449 = vld [vmem:[%s325 + $0xcc] sm:$0xf]
        %v450 = vld [vmem:[%s325 + $0xd0] sm:$0xf]
        %v451 = vld [vmem:[%s325 + $0xd4] sm:$0xf]
        %v452 = vld [vmem:[%s325 + $0xd8] sm:$0xf]
        %v453 = vld [vmem:[%s325 + $0xdc] sm:$0xf]
        %v454 = vld [vmem:[%s325 + $0xe0] sm:$0xf]
        %v455 = vld [vmem:[%s325 + $0xe4] sm:$0xf]
        %v456 = vld [vmem:[%s325 + $0xe8] sm:$0xf]
        %v457 = vld [vmem:[%s325 + $0xec] sm:$0xf]
        %v458 = vld [vmem:[%s325 + $0xf0] sm:$0xf]
        %v459 = vld [vmem:[%s325 + $0xf4] sm:$0xf]
        %v460 = vld [vmem:[%s325 + $0xf8] sm:$0xf]
        %v461 = vld [vmem:[%s325 + $0xfc] sm:$0xf]
        %v464 = vunpack.c.l.b16 %v396
        %v465 = vunpack.c.h.b16 %v396
        %v466 = vunpack.c.l.b16 %v397
        %v467 = vunpack.c.h.b16 %v397
        %v468 = vpack.c.b16 %v464, %v464
        %v469 = vpack.c.b16 %v465, %v465
        %v470 = vpack.c.b16 %v466, %v466
        %v471 = vpack.c.b16 %v467, %v467
        %v540 = vunpack.c.l.b16 %v398
        %v541 = vunpack.c.l.b16 %v399
        %v542 = vunpack.c.l.b16 %v400
        %v543 = vunpack.c.l.b16 %v401
        %v544 = vunpack.c.l.b16 %v402
        %v545 = vunpack.c.l.b16 %v403
        %v546 = vunpack.c.l.b16 %v404
        %v547 = vunpack.c.l.b16 %v405
        %v548 = vunpack.c.l.b16 %v406
        %v549 = vunpack.c.l.b16 %v407
        %v550 = vunpack.c.l.b16 %v408
        %v551 = vunpack.c.l.b16 %v409
        %v552 = vunpack.c.l.b16 %v410
        %v553 = vunpack.c.l.b16 %v411
        %v554 = vunpack.c.l.b16 %v412
        %v555 = vunpack.c.l.b16 %v413
        %v556 = vunpack.c.l.b16 %v414
        %v557 = vunpack.c.l.b16 %v415
        %v558 = vunpack.c.l.b16 %v416
        %v559 = vunpack.c.l.b16 %v417
        %v560 = vunpack.c.l.b16 %v418
        %v561 = vunpack.c.l.b16 %v419
        %v562 = vunpack.c.l.b16 %v420
        %v563 = vunpack.c.l.b16 %v421
        %v564 = vunpack.c.l.b16 %v422
        %v565 = vunpack.c.l.b16 %v423
        %v566 = vunpack.c.l.b16 %v424
        %v567 = vunpack.c.l.b16 %v425
        %v568 = vunpack.c.l.b16 %v426
        %v569 = vunpack.c.l.b16 %v427
        %v570 = vunpack.c.l.b16 %v428
        %v571 = vunpack.c.l.b16 %v429
        %v572 = vunpack.c.l.b16 %v430
        %v573 = vunpack.c.l.b16 %v431
        %v574 = vunpack.c.l.b16 %v432
        %v575 = vunpack.c.l.b16 %v433
        %v576 = vunpack.c.l.b16 %v434
        %v577 = vunpack.c.l.b16 %v435
        %v578 = vunpack.c.l.b16 %v436
        %v579 = vunpack.c.l.b16 %v437
        %v580 = vunpack.c.l.b16 %v438
        %v581 = vunpack.c.l.b16 %v439
        %v582 = vunpack.c.l.b16 %v440
        %v583 = vunpack.c.l.b16 %v441
        %v584 = vunpack.c.l.b16 %v442
        %v585 = vunpack.c.l.b16 %v443
        %v586 = vunpack.c.l.b16 %v444
        %v587 = vunpack.c.l.b16 %v445
        %v588 = vunpack.c.l.b16 %v446
        %v589 = vunpack.c.l.b16 %v447
        %v590 = vunpack.c.l.b16 %v448
        %v591 = vunpack.c.l.b16 %v449
        %v592 = vunpack.c.l.b16 %v450
        %v593 = vunpack.c.l.b16 %v451
        %v594 = vunpack.c.l.b16 %v452
        %v595 = vunpack.c.l.b16 %v453
        %v596 = vunpack.c.l.b16 %v454
        %v597 = vunpack.c.l.b16 %v455
        %v598 = vunpack.c.l.b16 %v456
        %v599 = vunpack.c.l.b16 %v457
        %v600 = vunpack.c.l.b16 %v458
        %v601 = vunpack.c.l.b16 %v459
        %v602 = vunpack.c.l.b16 %v460
        %v603 = vunpack.c.l.b16 %v461
        %v604 = vpack.c.b16 %v541, %v540
        %v605 = vpack.c.b16 %v543, %v542
        %v606 = vpack.c.b16 %v545, %v544
        %v607 = vpack.c.b16 %v547, %v546
        %v608 = vpack.c.b16 %v549, %v548
        %v609 = vpack.c.b16 %v551, %v550
        %v610 = vpack.c.b16 %v553, %v552
        %v611 = vpack.c.b16 %v555, %v554
        %v612 = vpack.c.b16 %v557, %v556
        %v613 = vpack.c.b16 %v559, %v558
        %v614 = vpack.c.b16 %v561, %v560
        %v615 = vpack.c.b16 %v563, %v562
        %v616 = vpack.c.b16 %v565, %v564
        %v617 = vpack.c.b16 %v567, %v566
        %v618 = vpack.c.b16 %v569, %v568
        %v619 = vpack.c.b16 %v571, %v570
        %v620 = vpack.c.b16 %v573, %v572
        %v621 = vpack.c.b16 %v575, %v574
        %v622 = vpack.c.b16 %v577, %v576
        %v623 = vpack.c.b16 %v579, %v578
        %v624 = vpack.c.b16 %v581, %v580
        %v625 = vpack.c.b16 %v583, %v582
        %v626 = vpack.c.b16 %v585, %v584
        %v627 = vpack.c.b16 %v587, %v586
        %v628 = vpack.c.b16 %v589, %v588
        %v629 = vpack.c.b16 %v591, %v590
        %v630 = vpack.c.b16 %v593, %v592
        %v631 = vpack.c.b16 %v595, %v594
        %v632 = vpack.c.b16 %v597, %v596
        %v633 = vpack.c.b16 %v599, %v598
        %v634 = vpack.c.b16 %v601, %v600
        %v635 = vpack.c.b16 %v603, %v602
        %668 = vmatprep.subr.bf16.mxu0 0
        %669 = vmatpush1.bf16.msra.mxu0 %v604
        %670 = vmatprep.subr.bf16.mxu0 0
        %671 = vmatpush1.bf16.msra.mxu0 %v605
        %672 = vmatprep.subr.bf16.mxu0 0
        %673 = vmatpush1.bf16.msra.mxu0 %v606
        %674 = vmatprep.subr.bf16.mxu0 0
        %675 = vmatpush1.bf16.msra.mxu0 %v607
        %676 = vmatprep.subr.bf16.mxu0 0
        %677 = vmatpush1.bf16.msra.mxu0 %v608
        %678 = vmatprep.subr.bf16.mxu0 0
        %679 = vmatpush1.bf16.msra.mxu0 %v609
        %680 = vmatprep.subr.bf16.mxu0 0
        %681 = vmatpush1.bf16.msra.mxu0 %v610
        %682 = vmatprep.subr.bf16.mxu0 0
        %683 = vmatpush1.bf16.msra.mxu0 %v611
        %684 = vmatprep.subr.bf16.mxu0 0
        %685 = vmatpush1.bf16.msra.mxu0 %v612
        %686 = vmatprep.subr.bf16.mxu0 0
        %687 = vmatpush1.bf16.msra.mxu0 %v613
        %688 = vmatprep.subr.bf16.mxu0 0
        %689 = vmatpush1.bf16.msra.mxu0 %v614
        %690 = vmatprep.subr.bf16.mxu0 0
        %691 = vmatpush1.bf16.msra.mxu0 %v615
        %692 = vmatprep.subr.bf16.mxu0 0
        %693 = vmatpush1.bf16.msra.mxu0 %v616
        %694 = vmatprep.subr.bf16.mxu0 0
        %695 = vmatpush1.bf16.msra.mxu0 %v617
        %696 = vmatprep.subr.bf16.mxu0 0
        %697 = vmatpush1.bf16.msra.mxu0 %v618
        %698 = vmatprep.subr.bf16.mxu0 0
        %699 = vmatpush1.bf16.msra.mxu0 %v619
        %700 = vmatprep.mubr.bf16.mxu0 %v469
        %701 = vmatmul.mubr.bf16.gmra.mrb[0].mxu0 %v468
        %v702 = vpop.f32.mrb[0].mxu0
        %v703 = vadd.f32 0.0, %v702
        %v704 = vpop.f32.mrb[0].mxu0
        %v705 = vpop.f32.mrb[0].mxu0
        %v706 = vpop.f32.mrb[0].mxu0
        %707 = vdwg.mxu0
        %708 = vmatprep.subr.bf16.mxu0 0
        %709 = vmatpush1.bf16.msra.mxu0 %v620
        %710 = vmatprep.subr.bf16.mxu0 0
        %711 = vmatpush1.bf16.msra.mxu0 %v621
        %712 = vmatprep.subr.bf16.mxu0 0
        %713 = vmatpush1.bf16.msra.mxu0 %v622
        %714 = vmatprep.subr.bf16.mxu0 0
        %715 = vmatpush1.bf16.msra.mxu0 %v623
        %716 = vmatprep.subr.bf16.mxu0 0
        %717 = vmatpush1.bf16.msra.mxu0 %v624
        %718 = vmatprep.subr.bf16.mxu0 0
        %719 = vmatpush1.bf16.msra.mxu0 %v625
        %720 = vmatprep.subr.bf16.mxu0 0
        %721 = vmatpush1.bf16.msra.mxu0 %v626
        %722 = vmatprep.subr.bf16.mxu0 0
        %723 = vmatpush1.bf16.msra.mxu0 %v627
        %724 = vmatprep.subr.bf16.mxu0 0
        %725 = vmatpush1.bf16.msra.mxu0 %v628
        %726 = vmatprep.subr.bf16.mxu0 0
        %727 = vmatpush1.bf16.msra.mxu0 %v629
        %728 = vmatprep.subr.bf16.mxu0 0
        %729 = vmatpush1.bf16.msra.mxu0 %v630
        %730 = vmatprep.subr.bf16.mxu0 0
        %731 = vmatpush1.bf16.msra.mxu0 %v631
        %732 = vmatprep.subr.bf16.mxu0 0
        %733 = vmatpush1.bf16.msra.mxu0 %v632
        %734 = vmatprep.subr.bf16.mxu0 0
        %735 = vmatpush1.bf16.msra.mxu0 %v633
        %736 = vmatprep.subr.bf16.mxu0 0
        %737 = vmatpush1.bf16.msra.mxu0 %v634
        %738 = vmatprep.subr.bf16.mxu0 0
        %739 = vmatpush1.bf16.msra.mxu0 %v635
        %740 = vmatprep.mubr.bf16.mxu0 %v471
        %741 = vmatmul.mubr.bf16.gmra.mrb[0].mxu0 %v470
        %v742 = vpop.f32.mrb[0].mxu0
        %v743 = vadd.f32 %v703, %v742
        %v744 = vpop.f32.mrb[0].mxu0
        %v745 = vpop.f32.mrb[0].mxu0
        %v746 = vpop.f32.mrb[0].mxu0
        %747 = vdwg.mxu0
        %v748 = vadd.f32 %v395, %v743
        %749 = vst [vmem:[#allocation2] sm:$0xff] %v748
        %p750 = scmp.eq.s32.totalorder %s31, 1
        // Predicated region
        $region61: #{tpu_custom_call.1} parent=43 // pred_check
          %p751 = pneg %p750
        $region62: #{tpu_custom_call.1} parent=43 // pred_check_branch
          %753 = sbr.rel (%p751) target = $region64
        $region63: #{tpu_custom_call.1} parent=43 // pred_region
          %v754 = vld [vmem:[%s380] sm:$0xff]
          %755 = vmax.xlane.f32.xlu0 %v754
          %v756 = vpop.xlane.xlu0 %755
          %v757 = vsub.f32 %v754, %v756
          %v758 = vmul.f32 %v757, 1.442695
          %v759 = vpow.pop %v758
          %760 = vadd.xlane.f32.xlu0 %v759
          %v761 = vpop.xlane.xlu0 %760
          %v762 = vlog2.pop %v761
          %v763 = vmul.f32 %v762, 0.6931472
          %v764 = vsub.f32 %v757, %v763
          %v765 = vlaneseq
          %v766 = vand.u32 %v765, 127
          %v767 = vld [vmem:[%s388] sm:$0xff]
          %768 = vset.pattern.permute.xlu0 0
          %769 = vperm.xlu0 %768, %v767
          %v770 = vpop.permute.xlu0 %769
          %vm771 = vcmp.eq.s32.totalorder %v766, %v770
          %v772 = vsel %vm771, 1, 0
          %v773 = vcvt.s32.f32 %v772
          %v774 = vmul.f32 %v773, %v764
          %775 = vadd.xlane.f32.xlu0 %v774
          %v776 = vpop.xlane.xlu0 %775
          %v777 = vrot.slane %v776, 4
          %v778 = vadd.f32 %v776, %v777
          %v779 = vrot.slane %v778, 2
          %v780 = vadd.f32 %v778, %v779
          %v781 = vrot.slane %v780, 1
          %v782 = vadd.f32 %v780, %v781
          %s783 = vtos %v782
          %s784 = ssub.f32 0.0, %s783
          %v785 = vld [vmem:[%s384] sm:$0xff]
          %v786 = vmul.f32 %v785, 0.33333334
          %787 = vmax.xlane.f32.xlu0 %v786
          %v788 = vpop.xlane.xlu0 %787
          %v789 = vsub.f32 %v786, %v788
          %v790 = vmul.f32 %v789, 1.442695
          %v791 = vpow.pop %v790
          %792 = vadd.xlane.f32.xlu0 %v791
          %v793 = vpop.xlane.xlu0 %792
          %v794 = vlog2.pop %v793
          %v795 = vmul.f32 %v794, 0.6931472
          %v796 = vsub.f32 %v789, %v795
          %v797 = vld [vmem:[#allocation2] sm:$0xff]
          %v798 = vld [vmem:[#allocation8] sm:$0x1]
          %v800 = vlaneseq
          %v801 = vshrl.u32 %v800, 7
          %v802 = vsub.s32 0, %v801
          %v803 = vrot.slane %v798, %v802
          %v805 = vadd.f32 %v797, %v803
          %v806 = vmul.f32 %v805, 0.33333334
          %807 = vmax.xlane.f32.xlu0 %v806
          %v808 = vpop.xlane.xlu0 %807
          %v809 = vsub.f32 %v806, %v808
          %v810 = vmul.f32 %v809, 1.442695
          %v811 = vpow.pop %v810
          %812 = vadd.xlane.f32.xlu0 %v811
          %v813 = vpop.xlane.xlu0 %812
          %v814 = vlog2.pop %v813
          %v815 = vmul.f32 %v814, 0.6931472
          %v816 = vsub.f32 %v809, %v815
          %v817 = vrcp.pop %v813
          %v818 = vmul.f32 %v811, %v817
          %v819 = vsub.f32 %v816, %v796
          %v820 = vmul.f32 %v818, %v819
          %821 = vadd.xlane.f32.xlu0 %v820
          %v822 = vpop.xlane.xlu0 %821
          %v823 = vrot.slane %v822, 4
          %v824 = vadd.f32 %v822, %v823
          %v825 = vrot.slane %v824, 2
          %v826 = vadd.f32 %v824, %v825
          %v827 = vrot.slane %v826, 1
          %v828 = vadd.f32 %v826, %v827
          %s829 = vtos %v828
          %s830 = smul.f32 %s784, 0.05625
          %s831 = smul.f32 %s829, 0.0004394531
          %s832 = sadd.f32 %s830, %s831
          %v833 = vlaneseq
          %v834 = vshrl.u32 %v833, 7
          %vm835 = vcmp.eq.s32.totalorder %v834, 0
          %vm836 = vcmp.eq.s32.totalorder %v766, 0
          %vm837 = vmand %vm835, %vm836
          %v838 = vstv %s832
          %v839 = vsel %vm837, %v838, 0.0
          %840 = vst [vmem:[%s374] sm:$0xff] %v839
        $region64: #{tpu_custom_call.1} parent=43 // pred_fallthru
          _
        %s841 = sand.u32 %s199, 1
        %s842 = scalar_lea.sflag [#allocation5], %s841
        %s843 = sand.u32 %s199, 1
        %s844 = smul.addr %s843, 8
        %s845 = scalar_lea.vmem [#allocation9], %s844
        // Predicated region
        $region65: #{tpu_custom_call.1} parent=43 // pred_check
          %p846 = pneg %p209
        $region66: #{tpu_custom_call.1} parent=43 // pred_check_branch
          %848 = sbr.rel (%p846) target = $region68
        $region67: #{tpu_custom_call.1} parent=43 // pred_region
          %s850 = ssub.s32 128, 128
          %851 = vsyncadd %s842, %s850
          %s852 = smul.addr %s30, 128
          %s853 = scalar_lea.hbm %s6, %s852
          %s855 = sshll.u32 %s845, 4
          %s856 = int_to_ptr.vmem [resolvable:$true] %s855
          %858 = dma.vmem_to_hbm [thread:$0]  %s856, 128, %s853, %s842
        $region68: #{tpu_custom_call.1} parent=43 // pred_fallthru
          _
      $region44: #{tpu_custom_call.1} parent=5 // pred_fallthru
        _
      %p859 = scmp.le.s32.totalorder 2, %s21
      // Predicated region
      $region69: #{tpu_custom_call.1} parent=5 // pred_check
        %p860 = pneg %p859
      $region70: #{tpu_custom_call.1} parent=5 // pred_check_branch
        %862 = sbr.rel (%p860) target = $region72
      $region71: #{tpu_custom_call.1} parent=5 // pred_region
        %s863 = ssub.s32 %s21, 2
        // Predicated region
        $region73: #{tpu_custom_call.1} parent=71 // pred_check
          %p864 = pneg %p215
        $region74: #{tpu_custom_call.1} parent=71 // pred_check_branch
          %866 = sbr.rel (%p864) target = $region76
        $region75: #{tpu_custom_call.1} parent=71 // pred_region
          %s867 = sand.u32 %s200, 1
          %s868 = scalar_lea.sflag [#allocation5], %s867
          %s869 = sand.u32 %s200, 1
          %s870 = smul.addr %s869, 8
          %s871 = scalar_lea.vmem [#allocation9], %s870
          %872 = dma.done %s868, 128
        $region76: #{tpu_custom_call.1} parent=71 // pred_fallthru
          _
      $region72: #{tpu_custom_call.1} parent=5 // pred_fallthru
        _
    $region6: #{tpu_custom_call.1} parent=1 // loop_footer
      %s25 = sadd.s32 1, %s21
    $region7: #{tpu_custom_call.1} parent=1 // loop_footer_branch
      %20 = sbr.rel target = $region3
    $region8: #{tpu_custom_call.1} parent=1 // loop_exit
      _
    %873 = vsyncpa [#allocation4], 1
    %s874 = scalar_lea.sflag [#allocation4], 1
    %875 = vsyncpa %s874, 1
    %876 = vsyncpa [#allocation7], 1
    %s877 = scalar_lea.sflag [#allocation7], 1
    %878 = vsyncpa %s877, 1
    %879 = vsyncpa [#allocation5], 1
    %s880 = scalar_lea.sflag [#allocation5], 1
    %881 = vsyncpa %s880, 1

</llo_original>
